<compile_context>
chip_gen: v7x
topology: tpu7x:2x2x1
jax: 0.10.0
libtpu: 0.0.40
codegen_flags: <defaults>
</compile_context>

<pallas_src>
import numpy as np
import jax
import jax.numpy as jnp
from jax import lax
from jax.experimental import pallas as pl
from jax.experimental.pallas import tpu as pltpu


def _round_up(x, m):
    return (x + m - 1) // m * m


# ----------------------------------------------------------------------------
# pltpu.roll direction probe (one tiny eager kernel, run before any jit trace).
# We rely on jnp.roll semantics (element i -> i+shift); pin it down on-device
# so the conv tap shifts are correct regardless of the lowering's convention.
# ----------------------------------------------------------------------------
_ROLL_MATCHES_JNP = None


def _ensure_roll_direction():
    global _ROLL_MATCHES_JNP
    if _ROLL_MATCHES_JNP is None:
        def k(x_ref, o_ref):
            o_ref[...] = pltpu.roll(x_ref[...], 1, 1)

        x = jnp.arange(8 * 128, dtype=jnp.float32).reshape(8, 128)
        y = np.asarray(pl.pallas_call(
            k, out_shape=jax.ShapeDtypeStruct((8, 128), jnp.float32))(x))
        # jnp.roll convention: element i moves to i+shift  =>  y[0,1]==x[0,0]==0
        _ROLL_MATCHES_JNP = bool(y[0, 1] == 0.0)
    return _ROLL_MATCHES_JNP


# ----------------------------------------------------------------------------
# Fused kernel factory (all sizes are static Python ints)
# ----------------------------------------------------------------------------
def _make_fused_kernel(N, C2, Cout, H1, W1, H2, W2,
                       pad_top, pad_left, P2pad, roll_matches_jnp):
    """Layout: channels on sublanes, flat zero-padded spatial index
    q = n*P2pad + ip*W2p + jp on lanes (P2pad is a multiple of 128)."""
    Ci = C2 + Cout
    S1 = H1 * W1
    W2p = W2 + 2
    L = N * P2pad
    n_valid = N * H2 * W2
    inv_cnt = 1.0 / float(n_valid)

    # conv1 reads the padded plane at nonnegative offsets; conv2 reads a1
    # (output-indexed) at signed offsets = its re-pad folded into the taps.
    tap1 = [kh * W2p + kw for kh in range(3) for kw in range(3)]
    tap2 = [(kh - 1) * W2p + (kw - 1) for kh in range(3) for kw in range(3)]

    def shifted(x, off):
        """shifted[..., q] == x[..., (q + off) % L]  (lane rotation on the XLU)."""
        off = off % L
        if off == 0:
            return x
        shift = (L - off) if roll_matches_jnp else off
        return pltpu.roll(x, shift, 1)

    def conv3x3(plane_bf, w_bf, cin, offs):
        # 3x3 conv as 9 accumulating (Cout, cin) x (cin, L) bf16 MXU matmuls.
        y = None
        for t, off in enumerate(offs):
            r = shifted(plane_bf, off)
            c = jnp.dot(w_bf[:, t * cin:(t + 1) * cin], r,
                        preferred_element_type=jnp.float32)
            y = c if y is None else y + c
        return y

    def bn_scale_shift(ym, gamma, beta):
        # Single-pass training-mode BatchNorm (biased batch variance over the
        # valid positions), folded into one scale/shift.  All f32.
        s1 = jnp.sum(ym, axis=1, keepdims=True)
        s2 = jnp.sum(ym * ym, axis=1, keepdims=True)
        mean = s1 * inv_cnt
        var = s2 * inv_cnt - mean * mean
        scale = gamma * lax.rsqrt(var + 1e-5)
        shift = beta - mean * scale
        return scale, shift

    def kernel(x1_ref, x2p_ref, wd_ref, bd4_ref,
               w1_ref, g1_ref, be1_ref,
               w2_ref, g2_ref, be2_ref,
               valid_ref, o_ref, cin1_ref):
        valid = valid_ref[...]                       # (1, L) f32 {0,1}

        # ---- conv1 input plane: rows [0,C2) = padded skip connection x2,
        #      rows [C2,Ci) = ConvTranspose2d(2, stride=2) upsample of x1.
        cin1_ref[pl.ds(0, C2), :] = x2p_ref[...]
        cin1_ref[pl.ds(C2, Cout), :] = jnp.zeros((Cout, L), jnp.float32)

        # ConvTranspose2d: the 4 (di,dj) kernel positions merged into one
        # (4*Cout, Ci) x (Ci, N*S1) bf16 matmul; bias added once (every
        # upsampled pixel gets it, the F.pad zeros do not).
        dall = jnp.dot(wd_ref[...], x1_ref[...],
                       preferred_element_type=jnp.float32) + bd4_ref[...]

        # Depth-to-space scatter with strided lane stores straight into the
        # zero-padded conv1 input plane (replaces the one-hot scatter matmul).
        for n in range(N):
            for di in range(2):
                for dj in range(2):
                    p = di * 2 + dj
                    for i1 in range(H1):
                        dst = (n * P2pad
                               + (1 + pad_top + 2 * i1 + di) * W2p
                               + (1 + pad_left + dj))
                        src = n * S1 + i1 * W1
                        cin1_ref[pl.ds(C2, Cout), pl.ds(dst, W1, 2)] = (
                            dall[p * Cout:(p + 1) * Cout, src:src + W1])

        # ---- conv1 (3x3, pad=1) + training-mode BN + ReLU -------------------
        plane1 = cin1_ref[...].astype(jnp.bfloat16)
        y1 = conv3x3(plane1, w1_ref[...], Ci, tap1)
        ym1 = y1 * valid                              # masked once, reused
        sc1, sh1 = bn_scale_shift(ym1, g1_ref[...], be1_ref[...])
        # a1 must be exactly zero wherever conv2's zero padding is read.
        a1 = jnp.maximum(ym1 * sc1 + sh1, 0.0) * valid

        # ---- conv2 (re-pad folded into signed tap offsets on a1) ------------
        y2 = conv3x3(a1.astype(jnp.bfloat16), w2_ref[...], Cout, tap2)
        ym2 = y2 * valid
        sc2, sh2 = bn_scale_shift(ym2, g2_ref[...], be2_ref[...])
        a2 = jnp.maximum(ym2 * sc2 + sh2, 0.0)

        # ---- pack valid pixels into (N*Cout, H2*W2): wrapper only reshapes --
        for n in range(N):
            for i in range(H2):
                src = n * P2pad + i * W2p
                o_ref[pl.ds(n * Cout, Cout), pl.ds(i * W2, W2)] = (
                    a2[:, src:src + W2])

    return kernel


# ----------------------------------------------------------------------------
# Module: deconv(ci, co)
# ----------------------------------------------------------------------------
def init_params(key, ci, co):
    ks = jax.random.split(key, 6)
    s = 0.1
    return {
        # ConvTranspose2d(ci, co, 2, stride=2): row (di*2+dj)*co + o, col = ci
        "wd": s * jax.random.normal(ks[0], (4 * co, ci), jnp.float32),
        "bd": s * jax.random.normal(ks[1], (co, 1), jnp.float32),
        # conv1 = Conv2d(ci, co, 3, pad=1) + BN(co): col (kh*3+kw)*ci + c
        "w1": s * jax.random.normal(ks[2], (co, 9 * ci), jnp.float32),
        "g1": 1.0 + s * jax.random.normal(ks[3], (co, 1), jnp.float32),
        "beta1": s * jax.random.normal(ks[4], (co, 1), jnp.float32),
        # conv2 = Conv2d(co, co, 3, pad=1) + BN(co)
        "w2": s * jax.random.normal(ks[5], (co, 9 * co), jnp.float32),
        "g2": jnp.ones((co, 1), jnp.float32),
        "beta2": jnp.zeros((co, 1), jnp.float32),
        # Conv2d biases intentionally omitted: exact no-op under training BN.
    }


def deconv_forward(x1_nchw, x2_nchw, params):
    N, Ci, H1, W1 = x1_nchw.shape
    N2, C2, H2, W2 = x2_nchw.shape
    Cout = params["bd"].shape[0]
    assert N == N2 and C2 + Cout == Ci

    # Reproduce the module's (odd) F.pad pairing: diffX (H difference) pads the
    # W-left side, diffY (W difference) pads the H-top side.
    pad_left = H2 - 2 * H1
    pad_top = W2 - 2 * W1
    assert pad_left >= 0 and pad_top >= 0

    H2p, W2p = H2 + 2, W2 + 2
    P2 = H2p * W2p
    P2pad = _round_up(P2, 128)         # 128-aligned per-image plane stride
    L = N * P2pad

    # --- tiny XLA-side input layout adapters; every intermediate activation
    #     stays inside the single fused Pallas kernel ---
    x1f = jnp.transpose(x1_nchw, (1, 0, 2, 3)).reshape(Ci, N * H1 * W1)
    x1f = x1f.astype(jnp.bfloat16)
    x2p = jnp.pad(jnp.transpose(x2_nchw, (1, 0, 2, 3)),
                  ((0, 0), (0, 0), (1, 1), (1, 1)))          # (C2, N, H2p, W2p)
    x2p = jnp.pad(x2p.reshape(C2, N, P2), ((0, 0), (0, 0), (0, P2pad - P2)))
    x2p = x2p.reshape(C2, L)

    # Valid-output mask over the flat padded layout (shape-only numpy const).
    f = np.arange(L) % P2pad
    valid = (((f // W2p) < H2) & ((f % W2p) < W2)).astype(np.float32)[None, :]

    roll_jnp = True if _ROLL_MATCHES_JNP is None else _ROLL_MATCHES_JNP
    kernel = _make_fused_kernel(N, C2, Cout, H1, W1, H2, W2,
                                pad_top, pad_left, P2pad, roll_jnp)

    vmem = pl.BlockSpec(memory_space=pltpu.MemorySpace.VMEM)
    out2d = pl.pallas_call(
        kernel,
        out_shape=jax.ShapeDtypeStruct((N * Cout, H2 * W2), jnp.float32),
        in_specs=[vmem] * 11,
        out_specs=vmem,
        scratch_shapes=[pltpu.VMEM((Ci, L), jnp.float32)],
        compiler_params=pltpu.CompilerParams(
            vmem_limit_bytes=32 * 1024 * 1024),
    )(x1f, x2p,
      params["wd"].astype(jnp.bfloat16),
      jnp.tile(params["bd"], (4, 1)),              # bias for the 4 (di,dj) rows
      params["w1"].astype(jnp.bfloat16),
      params["g1"], params["beta1"],
      params["w2"].astype(jnp.bfloat16),
      params["g2"], params["beta2"],
      jnp.asarray(valid))

    # (N*Cout, H2*W2) -> (N, Cout, H2, W2): a pure view, no data movement.
    return out2d.reshape(N, Cout, H2, W2)


if __name__ == "__main__":
    ci, co, N = 8, 4, 2

    key = jax.random.PRNGKey(0)
    k1, k2, kp = jax.random.split(key, 3)

    # x1: low-res feature map with ci channels; x2: skip connection whose
    # channel count (ci - co) makes cat([x2, upsample(x1)]) have ci channels.
    x1 = jax.random.normal(k1, (N, ci, 8, 8), jnp.float32)          # NCHW
    x2 = jax.random.normal(k2, (N, ci - co, 16, 16), jnp.float32)   # NCHW

    params = init_params(kp, ci, co)

    _ensure_roll_direction()          # eager probe, before any jit trace
    fwd = jax.jit(deconv_forward)
    out = fwd(x1, x2, params)
    jax.block_until_ready(out)
    assert out.shape == (N, co, 16, 16), out.shape
    assert bool(jnp.all(jnp.isfinite(out)))
    print("KERNEL_OK")
</pallas_src>

<mosaic_0001>
module attributes {stable_mosaic.version = 11 : i64} {
  func.func @k(%arg0: memref<8x128xf32, #tpu.memory_space<vmem>>, %arg1: memref<8x128xf32, #tpu.memory_space<vmem>>) attributes {dimension_semantics = [], scalar_prefetch = 0 : i64, scratch_operands = 0 : i64, tpu.core_type = #tpu.core_type<tc>} {
    %c0 = arith.constant 0 : index
    %c0_0 = arith.constant 0 : index
    %0 = vector.load %arg0[%c0, %c0_0] : memref<8x128xf32, #tpu.memory_space<vmem>>, vector<8x128xf32>
    %c1_i32 = arith.constant 1 : i32
    %1 = tpu.dynamic_rotate %0 by %c1_i32 dim 1 : vector<8x128xf32>, i32 -> vector<8x128xf32>
    %c0_1 = arith.constant 0 : index
    %c0_2 = arith.constant 0 : index
    %2 = vector.load %arg1[%c0_1, %c0_2] : memref<8x128xf32, #tpu.memory_space<vmem>>, vector<8x128xf32>
    tpu.vector_store %arg1[%c0_1, %c0_2], %1 {strides = array<i32>} : memref<8x128xf32, #tpu.memory_space<vmem>>, vector<8x128xf32>,
    return
  }
}

</mosaic_0001>

<llo_original>
// kernel: tpu_custom_call.1
$region0: #{tpu_custom_call.1}
  #allocation0 [shape = 'u32[]', space=smem, size = 0x4, offset = 0x4, fixed_abs, tag = 'smem constant byte address 0x4 - core index']
  #allocation1 [shape = 'u32[144,128]{1,0:T(1,128)}', space=vmem, size = 0x12000, scoped, tag = 'internal scratch']
  %s0 = inlined_call_operand.hbm [shape: f32[8,128], index: 0, kind: input, shape index: {}]
  %s1 = inlined_call_operand.hbm [shape: f32[8,128], index: 1, kind: output, shape index: {}]
  %s2 = sld [smem:[#allocation0]]
  $region18: #{tpu_custom_call.1} parent=0
    _
  %s4 = ssub.s32 1, %s2
  %s5 = scalar_select 0, %s4, %s2
  $region1: #{tpu_custom_call.1} parent=0
    #allocation2 [shape = 'u8[4096]{0}', space=vmem, size = 0x1000, scoped, tag = 'input window, operand 0, single buffered']
    #allocation3 [shape = 's32[1]{0}', space=sflag, size = 0x4, scoped, tag = 'scoped memory for tpu_custom_call.1']
    #allocation4 [shape = 's32[1]{0}', space=sflag, size = 0x4, scoped, tag = 'scoped memory for tpu_custom_call.1']
    #allocation5 [shape = 'u8[4096]{0}', space=vmem, size = 0x1000, scoped, tag = 'output window, operand 0, single buffered']
    %6 = vsyncpa [#allocation3], 0
    %7 = vsyncpa [#allocation4], 0
    // Predicated region
    $region2: #{tpu_custom_call.1} parent=1 // pred_check
      _
    $region3: #{tpu_custom_call.1} parent=1 // pred_check_branch
      %9 = sbr.rel (0) target = $region5
    $region4: #{tpu_custom_call.1} parent=1 // pred_region
      %s11 = ssub.s32 128, 128
      %12 = vsyncadd [#allocation3], %s11
      %s14 = sshll.u32 [#allocation2], 4
      %s15 = int_to_ptr.vmem [resolvable:$true] %s14
      %17 = dma.hbm_to_vmem [thread:$0]  %s0, 128, %s15, [#allocation3]
    $region5: #{tpu_custom_call.1} parent=1 // pred_fallthru
      _
    // Predicated region
    $region6: #{tpu_custom_call.1} parent=1 // pred_check
      _
    $region7: #{tpu_custom_call.1} parent=1 // pred_check_branch
      %19 = sbr.rel (0) target = $region9
    $region8: #{tpu_custom_call.1} parent=1 // pred_region
      %20 = dma.done [#allocation3], 128
    $region9: #{tpu_custom_call.1} parent=1 // pred_fallthru
      _
    %v21 = vld [vmem:[#allocation2] sm:$0xff]
    %22 = vrot.lane.b32.xlu0 %v21, 1
    %v23 = vpop.permute.xlu0 %22
    %24 = vst [vmem:[#allocation5] sm:$0xff] %v23
    // Predicated region
    $region10: #{tpu_custom_call.1} parent=1 // pred_check
      _
    $region11: #{tpu_custom_call.1} parent=1 // pred_check_branch
      %26 = sbr.rel (0) target = $region13
    $region12: #{tpu_custom_call.1} parent=1 // pred_region
      %s28 = ssub.s32 128, 128
      %29 = vsyncadd [#allocation4], %s28
      %s31 = sshll.u32 [#allocation5], 4
      %s32 = int_to_ptr.vmem [resolvable:$true] %s31
      %34 = dma.vmem_to_hbm [thread:$0]  %s32, 128, %s1, [#allocation4]
    $region13: #{tpu_custom_call.1} parent=1 // pred_fallthru
      _
    // Predicated region
    $region14: #{tpu_custom_call.1} parent=1 // pred_check
      _
    $region15: #{tpu_custom_call.1} parent=1 // pred_check_branch
      %36 = sbr.rel (0) target = $region17
    $region16: #{tpu_custom_call.1} parent=1 // pred_region
      %37 = dma.done [#allocation4], 128
    $region17: #{tpu_custom_call.1} parent=1 // pred_fallthru
      _
    %38 = vsyncpa [#allocation3], 1
    %39 = vsyncpa [#allocation4], 1

</llo_original>
